<compile_context>
chip_gen: v5e
topology: v5e:2x2
jax: 0.10.0
libtpu: 0.0.40
codegen_flags: <defaults>
</compile_context>

<pallas_src>
import jax
import jax.numpy as jnp
from jax.experimental import pallas as pl
from jax.experimental.pallas import tpu as pltpu


def _round_up(x, m):
    return ((x + m - 1) // m) * m


def _vmem_limit_bytes():
    # Generation-aware VMEM budget: ~3/4 of physical (96 MiB on v5e/v6e's 128 MiB,
    # 48 MiB on v7x's 64 MiB).  Falls back to a v7x-safe 48 MiB if the query fails.
    try:
        info = pltpu.get_tpu_info()
        cap = getattr(info, "vmem_capacity_bytes", None)
        if cap:
            return (int(cap) * 3) // 4
    except Exception:
        pass
    return 48 * 1024 * 1024


def _pick_batch_tiles(b8, batch_tile):
    # Split the batch evenly (bounds padding waste to < 8 rows per tile) and make
    # sure there are >= 2 tiles when B >= 16 so v7x's second TensorCore is used.
    nb = max(1, -(-b8 // batch_tile))
    if nb == 1 and b8 >= 16:
        nb = 2
    tb = _round_up(-(-b8 // nb), 8)
    return tb, nb


def _pick_hidden_tile(hid_p, hidden_tile):
    # Pick a lane-aligned output tile that divides hid_p and keeps one
    # (2, hid_p, tn) bf16 weight block comfortably inside VMEM (v7x budget).
    hidden_tile = max(128, (hidden_tile // 128) * 128)
    while hidden_tile > 128 and 2 * hid_p * hidden_tile * 2 > 12 * 1024 * 1024:
        hidden_tile -= 128
    if hid_p <= hidden_tile:
        return hid_p
    for tn in range(hidden_tile, 127, -128):
        if hid_p % tn == 0:
            return tn
    return 128


def _split_pad(z, rows, cols, dtype=jnp.float32):
    # complex (or real) (r, c) -> planar (2, rows, cols); real inputs get a zero
    # imaginary plane (matches cLinear's real->complex promotion).
    zr = jnp.real(z).astype(dtype)
    zi = jnp.imag(z).astype(dtype)
    z2 = jnp.stack([zr, zi], axis=0)
    pr, pc = rows - z2.shape[1], cols - z2.shape[2]
    if pr or pc:
        z2 = jnp.pad(z2, ((0, 0), (0, pr), (0, pc)))
    return z2


def _crnn_cell_kernel(x_ref, h_ref, wx_ref, wh_ref, b_ref, o_ref):
    # x_ref : (2, TB, In_p)    f32   [0]=real plane, [1]=imag plane
    # h_ref : (2, TB, Hid_p)   f32
    # wx_ref: (2, In_p, TN)    bf16  (pre-transposed Wx^T, N-tiled)
    # wh_ref: (2, Hid_p, TN)   bf16  (pre-transposed Wh^T, N-tiled)
    # b_ref : (2, 1, TN)       f32   (bx + bh, combined)
    # o_ref : (2, TB, TN)      f32
    xr = x_ref[0].astype(jnp.bfloat16)
    xi = x_ref[1].astype(jnp.bfloat16)
    hr = h_ref[0].astype(jnp.bfloat16)
    hi = h_ref[1].astype(jnp.bfloat16)
    wxr, wxi = wx_ref[0], wx_ref[1]
    whr, whi = wh_ref[0], wh_ref[1]
    br, bi = b_ref[0], b_ref[1]

    def mm(a, w):
        # native single-pass bf16 MXU matmul, f32 accumulation
        return jnp.dot(a, w, preferred_element_type=jnp.float32)

    # complex matmul: (ar + i*ai)(wr + i*wi) = (ar@wr - ai@wi) + i(ar@wi + ai@wr)
    # TODO(synk): Gauss 3-mult (8->6 dots) intentionally not applied -- at typical
    # RNN-cell sizes this kernel is weight-DMA bound and the trick adds 50% weight bytes.
    pre_re = mm(xr, wxr) - mm(xi, wxi) + mm(hr, whr) - mm(hi, whi) + br
    pre_im = mm(xr, wxi) + mm(xi, wxr) + mm(hr, whi) + mm(hi, whr) + bi

    # complexTanh: tanh applied to real / imaginary parts separately (EUP).
    o_ref[0] = jnp.tanh(pre_re)
    o_ref[1] = jnp.tanh(pre_im)


def crnn_cell_planar(x2, h2, wx2, wh2, b2, *, batch_tile=256, hidden_tile=512):
    """Fused cRNNCell step on planar (real/imag-stacked), TPU-padded operands.

    x2 : (2, B8, In_p)  f32      h2 : (2, B8, Hid_p) f32
    wx2: (2, In_p, Hid_p) bf16   wh2: (2, Hid_p, Hid_p) bf16   b2: (2, 1, Hid_p) f32
    Returns (2, B8, Hid_p) f32 -- directly reusable as the next-step h2, so a
    lax.scan over timesteps never leaves the planar layout.
    """
    _, b8, in_p = x2.shape
    hid_p = wh2.shape[1]
    tb, nb = _pick_batch_tiles(b8, batch_tile)
    b_p = tb * nb
    if b_p != b8:
        pad = ((0, 0), (0, b_p - b8), (0, 0))
        x2 = jnp.pad(x2, pad)
        h2 = jnp.pad(h2, pad)
    tn = _pick_hidden_tile(hid_p, hidden_tile)
    nn = hid_p // tn

    out2 = pl.pallas_call(
        _crnn_cell_kernel,
        # hidden-tile axis OUTER: weight blocks keep a constant index across the
        # inner batch loop, so they stay VMEM-resident and are streamed from HBM
        # exactly once per call; both axes are "parallel" (no reduction axis).
        grid=(nn, nb),
        in_specs=[
            pl.BlockSpec((2, tb, in_p), lambda j, i: (0, i, 0)),
            pl.BlockSpec((2, tb, hid_p), lambda j, i: (0, i, 0)),
            pl.BlockSpec((2, in_p, tn), lambda j, i: (0, 0, j)),
            pl.BlockSpec((2, hid_p, tn), lambda j, i: (0, 0, j)),
            pl.BlockSpec((2, 1, tn), lambda j, i: (0, 0, j)),
        ],
        out_specs=pl.BlockSpec((2, tb, tn), lambda j, i: (0, i, j)),
        out_shape=jax.ShapeDtypeStruct((2, b_p, hid_p), jnp.float32),
        compiler_params=pltpu.CompilerParams(
            dimension_semantics=("parallel", "parallel"),
            vmem_limit_bytes=_vmem_limit_bytes()),
    )(x2, h2, wx2, wh2, b2)

    return out2 if b_p == b8 else out2[:, :b8, :]


class CRNNCell:
    """JAX/Pallas equivalent of cRNNCell (forward only)."""

    def __init__(self, input_size, hidden_size, bias=True, *, key=None,
                 batch_tile=256, hidden_tile=512):
        if key is None:
            key = jax.random.PRNGKey(0)
        ks = jax.random.split(key, 4)

        def xavier_c(k, shape):
            fan_out, fan_in = shape
            limit = (6.0 / (fan_in + fan_out)) ** 0.5
            k1, k2 = jax.random.split(k)
            re = jax.random.uniform(k1, shape, jnp.float32, -limit, limit)
            im = jax.random.uniform(k2, shape, jnp.float32, -limit, limit)
            return jax.lax.complex(re, im)

        self.input_size = input_size
        self.hidden_size = hidden_size
        self.batch_tile = batch_tile
        self.hidden_tile = hidden_tile
        self.in_p = _round_up(input_size, 128)
        self.hid_p = _round_up(hidden_size, 128)

        # Reference (complex64) parameters, same semantics as the PyTorch module.
        self.wx = xavier_c(ks[0], (hidden_size, input_size))
        self.wh = xavier_c(ks[1], (hidden_size, hidden_size))
        if bias:
            self.bx = xavier_c(ks[2], (1, hidden_size))
            self.bh = xavier_c(ks[3], (1, hidden_size))
        else:
            self.bx = jnp.zeros((1, hidden_size), jnp.complex64)
            self.bh = jnp.zeros((1, hidden_size), jnp.complex64)

        # Hoisted, one-time weight preprocessing: transpose, real/imag split,
        # pad to lane-aligned shapes, bf16 (halves weight DMA + VMEM; MXU-native).
        self.wx2 = _split_pad(self.wx.T, self.in_p, self.hid_p, jnp.bfloat16)
        self.wh2 = _split_pad(self.wh.T, self.hid_p, self.hid_p, jnp.bfloat16)
        self.b2 = _split_pad(self.bx + self.bh, 1, self.hid_p, jnp.float32)

    # -- planar fast path (for lax.scan over timesteps) ------------------------
    def to_planar(self, z, feat_p):
        b = z.shape[0]
        return _split_pad(z, _round_up(b, 8), feat_p)

    def step_planar(self, x2, h2):
        return crnn_cell_planar(x2, h2, self.wx2, self.wh2, self.b2,
                                batch_tile=self.batch_tile,
                                hidden_tile=self.hidden_tile)

    # -- convenience complex64 path --------------------------------------------
    def __call__(self, x, h_prev):
        b = x.shape[0]
        x2 = self.to_planar(x, self.in_p)
        h2 = self.to_planar(h_prev, self.hid_p)
        o2 = self.step_planar(x2, h2)
        return jax.lax.complex(o2[0, :b, :self.hidden_size],
                               o2[1, :b, :self.hidden_size])


if __name__ == "__main__":
    key = jax.random.PRNGKey(0)
    k_cell, k_x, k_h = jax.random.split(key, 3)

    batch, input_size, hidden_size = 2, 16, 32
    cell = CRNNCell(input_size, hidden_size, bias=True, key=k_cell)

    def cnormal(k, shape):
        k1, k2 = jax.random.split(k)
        return jax.lax.complex(jax.random.normal(k1, shape, dtype=jnp.float32),
                               jax.random.normal(k2, shape, dtype=jnp.float32))

    x = cnormal(k_x, (batch, input_size))
    h_prev = cnormal(k_h, (batch, hidden_size))

    h = jax.block_until_ready(cell(x, h_prev))
    assert h.shape == (batch, hidden_size)
    assert h.dtype == jnp.complex64

    # Plain-JAX f32 reference (same semantics as the PyTorch module).  The kernel
    # runs its matmuls on the MXU's native single-pass bf16 path, so compare with
    # a correspondingly relaxed tolerance.
    pre = (jnp.matmul(x, cell.wx.T, precision=jax.lax.Precision.HIGHEST) + cell.bx
           + jnp.matmul(h_prev, cell.wh.T, precision=jax.lax.Precision.HIGHEST) + cell.bh)
    ref = jax.lax.complex(jnp.tanh(jnp.real(pre)), jnp.tanh(jnp.imag(pre)))
    assert jnp.allclose(h, ref, rtol=2e-2, atol=2e-2), \
        float(jnp.max(jnp.abs(h - ref)))

    print("KERNEL_OK")
</pallas_src>

<mosaic_0001>
module attributes {stable_mosaic.version = 11 : i64} {
  func.func @_crnn_cell_kernel(%arg0: i32, %arg1: i32, %arg2: memref<2x8x128xf32, #tpu.memory_space<vmem>>, %arg3: memref<2x8x128xf32, #tpu.memory_space<vmem>>, %arg4: memref<2x128x128xbf16, #tpu.memory_space<vmem>>, %arg5: memref<2x128x128xbf16, #tpu.memory_space<vmem>>, %arg6: memref<2x1x128xf32, #tpu.memory_space<vmem>>, %arg7: memref<2x8x128xf32, #tpu.memory_space<vmem>>) attributes {dimension_semantics = [#tpu.dimension_semantics<parallel>, #tpu.dimension_semantics<parallel>], iteration_bounds = array<i64: 1, 1>, scalar_prefetch = 0 : i64, scratch_operands = 0 : i64, tpu.core_type = #tpu.core_type<tc>, window_params = [{transform_indices = @transform_0, window_bounds = array<i64: 2, 8, 128>}, {transform_indices = @transform_1, window_bounds = array<i64: 2, 8, 128>}, {transform_indices = @transform_2, window_bounds = array<i64: 2, 128, 128>}, {transform_indices = @transform_3, window_bounds = array<i64: 2, 128, 128>}, {transform_indices = @transform_4, window_bounds = array<i64: 2, 1, 128>}, {transform_indices = @transform_5, window_bounds = array<i64: 2, 8, 128>}]} {
    %c0 = arith.constant 0 : index
    %c0_0 = arith.constant 0 : index
    %c0_1 = arith.constant 0 : index
    %0 = vector.load %arg2[%c0, %c0_0, %c0_1] : memref<2x8x128xf32, #tpu.memory_space<vmem>>, vector<1x8x128xf32>
    %1 = vector.shape_cast %0 : vector<1x8x128xf32> to vector<8x128xf32>
    %2 = arith.truncf %1 : vector<8x128xf32> to vector<8x128xbf16>
    %c1 = arith.constant 1 : index
    %c0_2 = arith.constant 0 : index
    %c0_3 = arith.constant 0 : index
    %3 = vector.load %arg2[%c1, %c0_2, %c0_3] : memref<2x8x128xf32, #tpu.memory_space<vmem>>, vector<1x8x128xf32>
    %4 = vector.shape_cast %3 : vector<1x8x128xf32> to vector<8x128xf32>
    %5 = arith.truncf %4 : vector<8x128xf32> to vector<8x128xbf16>
    %c0_4 = arith.constant 0 : index
    %c0_5 = arith.constant 0 : index
    %c0_6 = arith.constant 0 : index
    %6 = vector.load %arg3[%c0_4, %c0_5, %c0_6] : memref<2x8x128xf32, #tpu.memory_space<vmem>>, vector<1x8x128xf32>
    %7 = vector.shape_cast %6 : vector<1x8x128xf32> to vector<8x128xf32>
    %8 = arith.truncf %7 : vector<8x128xf32> to vector<8x128xbf16>
    %c1_7 = arith.constant 1 : index
    %c0_8 = arith.constant 0 : index
    %c0_9 = arith.constant 0 : index
    %9 = vector.load %arg3[%c1_7, %c0_8, %c0_9] : memref<2x8x128xf32, #tpu.memory_space<vmem>>, vector<1x8x128xf32>
    %10 = vector.shape_cast %9 : vector<1x8x128xf32> to vector<8x128xf32>
    %11 = arith.truncf %10 : vector<8x128xf32> to vector<8x128xbf16>
    %c0_10 = arith.constant 0 : index
    %c0_11 = arith.constant 0 : index
    %c0_12 = arith.constant 0 : index
    %12 = vector.load %arg4[%c0_10, %c0_11, %c0_12] : memref<2x128x128xbf16, #tpu.memory_space<vmem>>, vector<1x128x128xbf16>
    %13 = vector.shape_cast %12 : vector<1x128x128xbf16> to vector<128x128xbf16>
    %c1_13 = arith.constant 1 : index
    %c0_14 = arith.constant 0 : index
    %c0_15 = arith.constant 0 : index
    %14 = vector.load %arg4[%c1_13, %c0_14, %c0_15] : memref<2x128x128xbf16, #tpu.memory_space<vmem>>, vector<1x128x128xbf16>
    %15 = vector.shape_cast %14 : vector<1x128x128xbf16> to vector<128x128xbf16>
    %c0_16 = arith.constant 0 : index
    %c0_17 = arith.constant 0 : index
    %c0_18 = arith.constant 0 : index
    %16 = vector.load %arg5[%c0_16, %c0_17, %c0_18] : memref<2x128x128xbf16, #tpu.memory_space<vmem>>, vector<1x128x128xbf16>
    %17 = vector.shape_cast %16 : vector<1x128x128xbf16> to vector<128x128xbf16>
    %c1_19 = arith.constant 1 : index
    %c0_20 = arith.constant 0 : index
    %c0_21 = arith.constant 0 : index
    %18 = vector.load %arg5[%c1_19, %c0_20, %c0_21] : memref<2x128x128xbf16, #tpu.memory_space<vmem>>, vector<1x128x128xbf16>
    %19 = vector.shape_cast %18 : vector<1x128x128xbf16> to vector<128x128xbf16>
    %c0_22 = arith.constant 0 : index
    %c0_23 = arith.constant 0 : index
    %c0_24 = arith.constant 0 : index
    %20 = vector.load %arg6[%c0_22, %c0_23, %c0_24] : memref<2x1x128xf32, #tpu.memory_space<vmem>>, vector<1x1x128xf32>
    %21 = vector.shape_cast %20 : vector<1x1x128xf32> to vector<1x128xf32>
    %c1_25 = arith.constant 1 : index
    %c0_26 = arith.constant 0 : index
    %c0_27 = arith.constant 0 : index
    %22 = vector.load %arg6[%c1_25, %c0_26, %c0_27] : memref<2x1x128xf32, #tpu.memory_space<vmem>>, vector<1x1x128xf32>
    %23 = vector.shape_cast %22 : vector<1x1x128xf32> to vector<1x128xf32>
    %cst = arith.constant dense<0.000000e+00> : vector<8x128xf32>
    %24 = tpu.matmul %2, %13, %cst {dimension_numbers = #tpu.dot_dimension_numbers<[1], [0], [0], [1], [0, 0, 1, 1], [], []>} : vector<8x128xbf16>, vector<128x128xbf16>, vector<8x128xf32> -> vector<8x128xf32>
    %cst_28 = arith.constant dense<0.000000e+00> : vector<8x128xf32>
    %25 = tpu.matmul %5, %15, %cst_28 {dimension_numbers = #tpu.dot_dimension_numbers<[1], [0], [0], [1], [0, 0, 1, 1], [], []>} : vector<8x128xbf16>, vector<128x128xbf16>, vector<8x128xf32> -> vector<8x128xf32>
    %26 = arith.subf %24, %25 : vector<8x128xf32>
    %cst_29 = arith.constant dense<0.000000e+00> : vector<8x128xf32>
    %27 = tpu.matmul %8, %17, %cst_29 {dimension_numbers = #tpu.dot_dimension_numbers<[1], [0], [0], [1], [0, 0, 1, 1], [], []>} : vector<8x128xbf16>, vector<128x128xbf16>, vector<8x128xf32> -> vector<8x128xf32>
    %28 = arith.addf %26, %27 : vector<8x128xf32>
    %cst_30 = arith.constant dense<0.000000e+00> : vector<8x128xf32>
    %29 = tpu.matmul %11, %19, %cst_30 {dimension_numbers = #tpu.dot_dimension_numbers<[1], [0], [0], [1], [0, 0, 1, 1], [], []>} : vector<8x128xbf16>, vector<128x128xbf16>, vector<8x128xf32> -> vector<8x128xf32>
    %30 = arith.subf %28, %29 : vector<8x128xf32>
    %31 = vector.broadcast %21 : vector<1x128xf32> to vector<8x128xf32>
    %32 = arith.addf %30, %31 : vector<8x128xf32>
    %cst_31 = arith.constant dense<0.000000e+00> : vector<8x128xf32>
    %33 = tpu.matmul %2, %15, %cst_31 {dimension_numbers = #tpu.dot_dimension_numbers<[1], [0], [0], [1], [0, 0, 1, 1], [], []>} : vector<8x128xbf16>, vector<128x128xbf16>, vector<8x128xf32> -> vector<8x128xf32>
    %cst_32 = arith.constant dense<0.000000e+00> : vector<8x128xf32>
    %34 = tpu.matmul %5, %13, %cst_32 {dimension_numbers = #tpu.dot_dimension_numbers<[1], [0], [0], [1], [0, 0, 1, 1], [], []>} : vector<8x128xbf16>, vector<128x128xbf16>, vector<8x128xf32> -> vector<8x128xf32>
    %35 = arith.addf %33, %34 : vector<8x128xf32>
    %cst_33 = arith.constant dense<0.000000e+00> : vector<8x128xf32>
    %36 = tpu.matmul %8, %19, %cst_33 {dimension_numbers = #tpu.dot_dimension_numbers<[1], [0], [0], [1], [0, 0, 1, 1], [], []>} : vector<8x128xbf16>, vector<128x128xbf16>, vector<8x128xf32> -> vector<8x128xf32>
    %37 = arith.addf %35, %36 : vector<8x128xf32>
    %cst_34 = arith.constant dense<0.000000e+00> : vector<8x128xf32>
    %38 = tpu.matmul %11, %17, %cst_34 {dimension_numbers = #tpu.dot_dimension_numbers<[1], [0], [0], [1], [0, 0, 1, 1], [], []>} : vector<8x128xbf16>, vector<128x128xbf16>, vector<8x128xf32> -> vector<8x128xf32>
    %39 = arith.addf %37, %38 : vector<8x128xf32>
    %40 = vector.broadcast %23 : vector<1x128xf32> to vector<8x128xf32>
    %41 = arith.addf %39, %40 : vector<8x128xf32>
    %42 = math.tanh %32 : vector<8x128xf32>
    %c0_35 = arith.constant 0 : index
    %c0_36 = arith.constant 0 : index
    %c0_37 = arith.constant 0 : index
    %43 = vector.load %arg7[%c0_35, %c0_36, %c0_37] : memref<2x8x128xf32, #tpu.memory_space<vmem>>, vector<1x8x128xf32>
    %44 = vector.shape_cast %43 : vector<1x8x128xf32> to vector<8x128xf32>
    %45 = vector.shape_cast %42 : vector<8x128xf32> to vector<1x8x128xf32>
    tpu.vector_store %arg7[%c0_35, %c0_36, %c0_37], %45 {strides = array<i32>} : memref<2x8x128xf32, #tpu.memory_space<vmem>>, vector<1x8x128xf32>,
    %46 = math.tanh %41 : vector<8x128xf32>
    %c1_38 = arith.constant 1 : index
    %c0_39 = arith.constant 0 : index
    %c0_40 = arith.constant 0 : index
    %47 = vector.load %arg7[%c1_38, %c0_39, %c0_40] : memref<2x8x128xf32, #tpu.memory_space<vmem>>, vector<1x8x128xf32>
    %48 = vector.shape_cast %47 : vector<1x8x128xf32> to vector<8x128xf32>
    %49 = vector.shape_cast %46 : vector<8x128xf32> to vector<1x8x128xf32>
    tpu.vector_store %arg7[%c1_38, %c0_39, %c0_40], %49 {strides = array<i32>} : memref<2x8x128xf32, #tpu.memory_space<vmem>>, vector<1x8x128xf32>,
    return
  }
  func.func @transform_0(%arg0: i32, %arg1: i32) -> (i32, i32, i32) {
    %c0_i32 = arith.constant 0 : i32
    %c0_i32_0 = arith.constant 0 : i32
    %c0_i32_1 = arith.constant 0 : i32
    return %c0_i32, %arg1, %c0_i32_0 : i32, i32, i32
  }
  func.func @transform_1(%arg0: i32, %arg1: i32) -> (i32, i32, i32) {
    %c0_i32 = arith.constant 0 : i32
    %c0_i32_0 = arith.constant 0 : i32
    %c0_i32_1 = arith.constant 0 : i32
    return %c0_i32, %arg1, %c0_i32_0 : i32, i32, i32
  }
  func.func @transform_2(%arg0: i32, %arg1: i32) -> (i32, i32, i32) {
    %c0_i32 = arith.constant 0 : i32
    %c0_i32_0 = arith.constant 0 : i32
    %c0_i32_1 = arith.constant 0 : i32
    return %c0_i32, %c0_i32_0, %arg0 : i32, i32, i32
  }
  func.func @transform_3(%arg0: i32, %arg1: i32) -> (i32, i32, i32) {
    %c0_i32 = arith.constant 0 : i32
    %c0_i32_0 = arith.constant 0 : i32
    %c0_i32_1 = arith.constant 0 : i32
    return %c0_i32, %c0_i32_0, %arg0 : i32, i32, i32
  }
  func.func @transform_4(%arg0: i32, %arg1: i32) -> (i32, i32, i32) {
    %c0_i32 = arith.constant 0 : i32
    %c0_i32_0 = arith.constant 0 : i32
    %c0_i32_1 = arith.constant 0 : i32
    return %c0_i32, %c0_i32_0, %arg0 : i32, i32, i32
  }
  func.func @transform_5(%arg0: i32, %arg1: i32) -> (i32, i32, i32) {
    %c0_i32 = arith.constant 0 : i32
    %c0_i32_0 = arith.constant 0 : i32
    return %c0_i32, %arg1, %arg0 : i32, i32, i32
  }
}

</mosaic_0001>

<llo_original>
// kernel: tpu_custom_call.1
$region0: #{tpu_custom_call.1}
  #allocation0 [shape = 'u32[]', space=smem, size = 0x4, offset = 0x4, fixed_abs, tag = 'smem constant byte address 0x4 - core index']
  #allocation1 [shape = 'u32[72,128]{1,0:T(1,128)}', space=vmem, size = 0x9000, scoped, tag = 'internal scratch']
  %s0 = inlined_call_operand.hbm [shape: f32[2,8,128], index: 0, kind: input, shape index: {}]
  %s1 = inlined_call_operand.hbm [shape: f32[2,8,128], index: 1, kind: input, shape index: {}]
  %s2 = inlined_call_operand.hbm [shape: bf16[2,128,128], index: 2, kind: input, shape index: {}]
  %s3 = inlined_call_operand.hbm [shape: bf16[2,128,128], index: 3, kind: input, shape index: {}]
  %s4 = inlined_call_operand.vmem [shape: f32[2,1,128], index: 4, kind: input, shape index: {}]
  %s5 = inlined_call_operand.hbm [shape: f32[2,8,128], index: 5, kind: output, shape index: {}]
  %s6 = sld [smem:[#allocation0]]
  $region46: #{tpu_custom_call.1} parent=0
    _
  %s8 = ssub.s32 1, %s6
  %s9 = scalar_select 0, %s8, %s6
  $region1: #{tpu_custom_call.1} parent=0
    #allocation2 [shape = 'u8[8192]{0}', space=vmem, size = 0x2000, scoped, tag = 'input window, operand 0, single buffered']
    #allocation3 [shape = 's32[1]{0}', space=sflag, size = 0x4, scoped, tag = 'scoped memory for tpu_custom_call.1']
    #allocation4 [shape = 's32[1]{0}', space=sflag, size = 0x4, scoped, tag = 'scoped memory for tpu_custom_call.1']
    #allocation5 [shape = 'u8[8192]{0}', space=vmem, size = 0x2000, scoped, tag = 'input window, operand 1, single buffered']
    #allocation6 [shape = 's32[1]{0}', space=sflag, size = 0x4, scoped, tag = 'scoped memory for tpu_custom_call.1']
    #allocation7 [shape = 'u8[65536]{0}', space=vmem, size = 0x10000, scoped, tag = 'input window, operand 2, single buffered']
    #allocation8 [shape = 'u8[65536]{0}', space=vmem, size = 0x10000, scoped, tag = 'input window, operand 3, single buffered']
    #allocation9 [shape = 's32[1]{0}', space=sflag, size = 0x4, scoped, tag = 'scoped memory for tpu_custom_call.1']
    #allocation10 [shape = 'u8[8192]{0}', space=vmem, size = 0x2000, scoped, tag = 'output window, operand 0, single buffered']
    %10 = vsyncpa [#allocation3], 0
    %11 = vsyncpa [#allocation6], 0
    %12 = vsyncpa [#allocation9], 0
    %13 = vsyncpa [#allocation4], 0
    // Predicated region
    $region2: #{tpu_custom_call.1} parent=1 // pred_check
      _
    $region3: #{tpu_custom_call.1} parent=1 // pred_check_branch
      %15 = sbr.rel (0) target = $region5
    $region4: #{tpu_custom_call.1} parent=1 // pred_region
      %17 = vsyncadd [#allocation3], 0
      %s18 = sshll.u32 %s0, 4
      %s19 = int_to_ptr.hbm [resolvable:$true] %s18
      %s20 = sshll.u32 [#allocation2], 4
      %s21 = int_to_ptr.vmem [resolvable:$true] %s20
      %26 = dma.hbm_to_vmem [thread:$0]  %s19, 256, %s21, [#allocation3], 128, 128, 8
    $region5: #{tpu_custom_call.1} parent=1 // pred_fallthru
      _
    // Predicated region
    $region6: #{tpu_custom_call.1} parent=1 // pred_check
      _
    $region7: #{tpu_custom_call.1} parent=1 // pred_check_branch
      %28 = sbr.rel (0) target = $region9
    $region8: #{tpu_custom_call.1} parent=1 // pred_region
      %30 = vsyncadd [#allocation6], 0
      %s31 = sshll.u32 %s1, 4
      %s32 = int_to_ptr.hbm [resolvable:$true] %s31
      %s33 = sshll.u32 [#allocation5], 4
      %s34 = int_to_ptr.vmem [resolvable:$true] %s33
      %39 = dma.hbm_to_vmem [thread:$0]  %s32, 256, %s34, [#allocation6], 128, 128, 8
    $region9: #{tpu_custom_call.1} parent=1 // pred_fallthru
      _
    // Predicated region
    $region10: #{tpu_custom_call.1} parent=1 // pred_check
      _
    $region11: #{tpu_custom_call.1} parent=1 // pred_check_branch
      %41 = sbr.rel (0) target = $region13
    $region12: #{tpu_custom_call.1} parent=1 // pred_region
      %43 = vsyncadd [#allocation6], 0
      %s44 = sshll.u32 %s2, 4
      %s45 = int_to_ptr.hbm [resolvable:$true] %s44
      %s46 = sshll.u32 [#allocation7], 4
      %s47 = int_to_ptr.vmem [resolvable:$true] %s46
      %52 = dma.hbm_to_vmem [thread:$0]  %s45, 2048, %s47, [#allocation6], 64, 64, 4
    $region13: #{tpu_custom_call.1} parent=1 // pred_fallthru
      _
    // Predicated region
    $region14: #{tpu_custom_call.1} parent=1 // pred_check
      _
    $region15: #{tpu_custom_call.1} parent=1 // pred_check_branch
      %54 = sbr.rel (0) target = $region17
    $region16: #{tpu_custom_call.1} parent=1 // pred_region
      %56 = vsyncadd [#allocation9], 0
      %s57 = sshll.u32 %s3, 4
      %s58 = int_to_ptr.hbm [resolvable:$true] %s57
      %s59 = sshll.u32 [#allocation8], 4
      %s60 = int_to_ptr.vmem [resolvable:$true] %s59
      %65 = dma.hbm_to_vmem [thread:$0]  %s58, 2048, %s60, [#allocation9], 64, 64, 4
    $region17: #{tpu_custom_call.1} parent=1 // pred_fallthru
      _
    // Predicated region
    $region18: #{tpu_custom_call.1} parent=1 // pred_check
      _
    $region19: #{tpu_custom_call.1} parent=1 // pred_check_branch
      %67 = sbr.rel (0) target = $region21
    $region20: #{tpu_custom_call.1} parent=1 // pred_region
      _
    $region21: #{tpu_custom_call.1} parent=1 // pred_fallthru
      _
    // Predicated region
    $region22: #{tpu_custom_call.1} parent=1 // pred_check
      _
    $region23: #{tpu_custom_call.1} parent=1 // pred_check_branch
      %69 = sbr.rel (0) target = $region25
    $region24: #{tpu_custom_call.1} parent=1 // pred_region
      %71 = dma.done [#allocation3], 256
    $region25: #{tpu_custom_call.1} parent=1 // pred_fallthru
      _
    // Predicated region
    $region26: #{tpu_custom_call.1} parent=1 // pred_check
      _
    $region27: #{tpu_custom_call.1} parent=1 // pred_check_branch
      %73 = sbr.rel (0) target = $region29
    $region28: #{tpu_custom_call.1} parent=1 // pred_region
      %75 = dma.done [#allocation6], 256
    $region29: #{tpu_custom_call.1} parent=1 // pred_fallthru
      _
    // Predicated region
    $region30: #{tpu_custom_call.1} parent=1 // pred_check
      _
    $region31: #{tpu_custom_call.1} parent=1 // pred_check_branch
      %77 = sbr.rel (0) target = $region33
    $region32: #{tpu_custom_call.1} parent=1 // pred_region
      %79 = dma.done [#allocation6], 2048
    $region33: #{tpu_custom_call.1} parent=1 // pred_fallthru
      _
    // Predicated region
    $region34: #{tpu_custom_call.1} parent=1 // pred_check
      _
    $region35: #{tpu_custom_call.1} parent=1 // pred_check_branch
      %81 = sbr.rel (0) target = $region37
    $region36: #{tpu_custom_call.1} parent=1 // pred_region
      %83 = dma.done [#allocation9], 2048
    $region37: #{tpu_custom_call.1} parent=1 // pred_fallthru
      _
    %v84 = vld [vmem:[#allocation2] sm:$0xff]
    %v85 = vpack.c.bf16 %v84, %v84
    %s86 = scalar_lea.vmem [#allocation2], 8
    %v87 = vld [vmem:[%s86] sm:$0xff]
    %v88 = vpack.c.bf16 %v87, %v87
    %v89 = vld [vmem:[#allocation5] sm:$0xff]
    %v90 = vpack.c.bf16 %v89, %v89
    %s91 = scalar_lea.vmem [#allocation5], 8
    %v92 = vld [vmem:[%s91] sm:$0xff]
    %v93 = vpack.c.bf16 %v92, %v92
    %v94 = vld [vmem:[#allocation7] sm:$0xf]
    %v95 = vld [vmem:[#allocation7 + $0x4] sm:$0xf]
    %v96 = vld [vmem:[#allocation7 + $0x8] sm:$0xf]
    %v97 = vld [vmem:[#allocation7 + $0xc] sm:$0xf]
    %v98 = vld [vmem:[#allocation7 + $0x10] sm:$0xf]
    %v99 = vld [vmem:[#allocation7 + $0x14] sm:$0xf]
    %v100 = vld [vmem:[#allocation7 + $0x18] sm:$0xf]
    %v101 = vld [vmem:[#allocation7 + $0x1c] sm:$0xf]
    %v102 = vld [vmem:[#allocation7 + $0x20] sm:$0xf]
    %v103 = vld [vmem:[#allocation7 + $0x24] sm:$0xf]
    %v104 = vld [vmem:[#allocation7 + $0x28] sm:$0xf]
    %v105 = vld [vmem:[#allocation7 + $0x2c] sm:$0xf]
    %v106 = vld [vmem:[#allocation7 + $0x30] sm:$0xf]
    %v107 = vld [vmem:[#allocation7 + $0x34] sm:$0xf]
    %v108 = vld [vmem:[#allocation7 + $0x38] sm:$0xf]
    %v109 = vld [vmem:[#allocation7 + $0x3c] sm:$0xf]
    %s110 = scalar_lea.vmem [#allocation7], 64
    %v111 = vld [vmem:[%s110] sm:$0xf]
    %v112 = vld [vmem:[%s110 + $0x4] sm:$0xf]
    %v113 = vld [vmem:[%s110 + $0x8] sm:$0xf]
    %v114 = vld [vmem:[%s110 + $0xc] sm:$0xf]
    %v115 = vld [vmem:[%s110 + $0x10] sm:$0xf]
    %v116 = vld [vmem:[%s110 + $0x14] sm:$0xf]
    %v117 = vld [vmem:[%s110 + $0x18] sm:$0xf]
    %v118 = vld [vmem:[%s110 + $0x1c] sm:$0xf]
    %v119 = vld [vmem:[%s110 + $0x20] sm:$0xf]
    %v120 = vld [vmem:[%s110 + $0x24] sm:$0xf]
    %v121 = vld [vmem:[%s110 + $0x28] sm:$0xf]
    %v122 = vld [vmem:[%s110 + $0x2c] sm:$0xf]
    %v123 = vld [vmem:[%s110 + $0x30] sm:$0xf]
    %v124 = vld [vmem:[%s110 + $0x34] sm:$0xf]
    %v125 = vld [vmem:[%s110 + $0x38] sm:$0xf]
    %v126 = vld [vmem:[%s110 + $0x3c] sm:$0xf]
    %v127 = vld [vmem:[#allocation8] sm:$0xf]
    %v128 = vld [vmem:[#allocation8 + $0x4] sm:$0xf]
    %v129 = vld [vmem:[#allocation8 + $0x8] sm:$0xf]
    %v130 = vld [vmem:[#allocation8 + $0xc] sm:$0xf]
    %v131 = vld [vmem:[#allocation8 + $0x10] sm:$0xf]
    %v132 = vld [vmem:[#allocation8 + $0x14] sm:$0xf]
    %v133 = vld [vmem:[#allocation8 + $0x18] sm:$0xf]
    %v134 = vld [vmem:[#allocation8 + $0x1c] sm:$0xf]
    %v135 = vld [vmem:[#allocation8 + $0x20] sm:$0xf]
    %v136 = vld [vmem:[#allocation8 + $0x24] sm:$0xf]
    %v137 = vld [vmem:[#allocation8 + $0x28] sm:$0xf]
    %v138 = vld [vmem:[#allocation8 + $0x2c] sm:$0xf]
    %v139 = vld [vmem:[#allocation8 + $0x30] sm:$0xf]
    %v140 = vld [vmem:[#allocation8 + $0x34] sm:$0xf]
    %v141 = vld [vmem:[#allocation8 + $0x38] sm:$0xf]
    %v142 = vld [vmem:[#allocation8 + $0x3c] sm:$0xf]
    %s143 = scalar_lea.vmem [#allocation8], 64
    %v144 = vld [vmem:[%s143] sm:$0xf]
    %v145 = vld [vmem:[%s143 + $0x4] sm:$0xf]
    %v146 = vld [vmem:[%s143 + $0x8] sm:$0xf]
    %v147 = vld [vmem:[%s143 + $0xc] sm:$0xf]
    %v148 = vld [vmem:[%s143 + $0x10] sm:$0xf]
    %v149 = vld [vmem:[%s143 + $0x14] sm:$0xf]
    %v150 = vld [vmem:[%s143 + $0x18] sm:$0xf]
    %v151 = vld [vmem:[%s143 + $0x1c] sm:$0xf]
    %v152 = vld [vmem:[%s143 + $0x20] sm:$0xf]
    %v153 = vld [vmem:[%s143 + $0x24] sm:$0xf]
    %v154 = vld [vmem:[%s143 + $0x28] sm:$0xf]
    %v155 = vld [vmem:[%s143 + $0x2c] sm:$0xf]
    %v156 = vld [vmem:[%s143 + $0x30] sm:$0xf]
    %v157 = vld [vmem:[%s143 + $0x34] sm:$0xf]
    %v158 = vld [vmem:[%s143 + $0x38] sm:$0xf]
    %v159 = vld [vmem:[%s143 + $0x3c] sm:$0xf]
    %v160 = vld [vmem:[%s4] sm:$0x1]
    %s161 = scalar_lea.vmem %s4, 1
    %v162 = vld [vmem:[%s161] sm:$0x1]
    %v179 = vunpack.c.l.b16 %v94
    %v180 = vunpack.c.l.b16 %v95
    %v181 = vunpack.c.l.b16 %v96
    %v182 = vunpack.c.l.b16 %v97
    %v183 = vunpack.c.l.b16 %v98
    %v184 = vunpack.c.l.b16 %v99
    %v185 = vunpack.c.l.b16 %v100
    %v186 = vunpack.c.l.b16 %v101
    %v187 = vunpack.c.l.b16 %v102
    %v188 = vunpack.c.l.b16 %v103
    %v189 = vunpack.c.l.b16 %v104
    %v190 = vunpack.c.l.b16 %v105
    %v191 = vunpack.c.l.b16 %v106
    %v192 = vunpack.c.l.b16 %v107
    %v193 = vunpack.c.l.b16 %v108
    %v194 = vunpack.c.l.b16 %v109
    %v195 = vpack.c.b16 %v180, %v179
    %v196 = vpack.c.b16 %v182, %v181
    %v197 = vpack.c.b16 %v184, %v183
    %v198 = vpack.c.b16 %v186, %v185
    %v199 = vpack.c.b16 %v188, %v187
    %v200 = vpack.c.b16 %v190, %v189
    %v201 = vpack.c.b16 %v192, %v191
    %v202 = vpack.c.b16 %v194, %v193
    %211 = vmatpush.bf16.msra.mxu0 %v202
    %212 = vmatpush.bf16.msra.mxu0 %v201
    %213 = vmatpush.bf16.msra.mxu0 %v200
    %214 = vmatpush.bf16.msra.mxu0 %v199
    %215 = vmatpush.bf16.msra.mxu0 %v198
    %216 = vmatpush.bf16.msra.mxu0 %v197
    %217 = vmatpush.bf16.msra.mxu0 %v196
    %218 = vmatpush.bf16.msra.mxu0 %v195
    %219 = vmatmul.bf16.gmra.mxu0 %v85
    %v220 = vpop.f32.mrf.mxu0
    %v221 = vadd.f32 0.0, %v220
    %v222 = vpop.f32.mrf.mxu0
    %223 = vdwg.mxu0
    %v240 = vunpack.c.l.b16 %v111
    %v241 = vunpack.c.l.b16 %v112
    %v242 = vunpack.c.l.b16 %v113
    %v243 = vunpack.c.l.b16 %v114
    %v244 = vunpack.c.l.b16 %v115
    %v245 = vunpack.c.l.b16 %v116
    %v246 = vunpack.c.l.b16 %v117
    %v247 = vunpack.c.l.b16 %v118
    %v248 = vunpack.c.l.b16 %v119
    %v249 = vunpack.c.l.b16 %v120
    %v250 = vunpack.c.l.b16 %v121
    %v251 = vunpack.c.l.b16 %v122
    %v252 = vunpack.c.l.b16 %v123
    %v253 = vunpack.c.l.b16 %v124
    %v254 = vunpack.c.l.b16 %v125
    %v255 = vunpack.c.l.b16 %v126
    %v256 = vpack.c.b16 %v241, %v240
    %v257 = vpack.c.b16 %v243, %v242
    %v258 = vpack.c.b16 %v245, %v244
    %v259 = vpack.c.b16 %v247, %v246
    %v260 = vpack.c.b16 %v249, %v248
    %v261 = vpack.c.b16 %v251, %v250
    %v262 = vpack.c.b16 %v253, %v252
    %v263 = vpack.c.b16 %v255, %v254
    %272 = vmatpush.bf16.msra.mxu0 %v263
    %273 = vmatpush.bf16.msra.mxu0 %v262
    %274 = vmatpush.bf16.msra.mxu0 %v261
    %275 = vmatpush.bf16.msra.mxu0 %v260
    %276 = vmatpush.bf16.msra.mxu0 %v259
    %277 = vmatpush.bf16.msra.mxu0 %v258
    %278 = vmatpush.bf16.msra.mxu0 %v257
    %279 = vmatpush.bf16.msra.mxu0 %v256
    %280 = vmatmul.bf16.gmra.mxu0 %v88
    %v281 = vpop.f32.mrf.mxu0
    %v282 = vadd.f32 0.0, %v281
    %v283 = vpop.f32.mrf.mxu0
    %284 = vdwg.mxu0
    %v285 = vsub.f32 %v221, %v282
    %v302 = vunpack.c.l.b16 %v127
    %v303 = vunpack.c.l.b16 %v128
    %v304 = vunpack.c.l.b16 %v129
    %v305 = vunpack.c.l.b16 %v130
    %v306 = vunpack.c.l.b16 %v131
    %v307 = vunpack.c.l.b16 %v132
    %v308 = vunpack.c.l.b16 %v133
    %v309 = vunpack.c.l.b16 %v134
    %v310 = vunpack.c.l.b16 %v135
    %v311 = vunpack.c.l.b16 %v136
    %v312 = vunpack.c.l.b16 %v137
    %v313 = vunpack.c.l.b16 %v138
    %v314 = vunpack.c.l.b16 %v139
    %v315 = vunpack.c.l.b16 %v140
    %v316 = vunpack.c.l.b16 %v141
    %v317 = vunpack.c.l.b16 %v142
    %v318 = vpack.c.b16 %v303, %v302
    %v319 = vpack.c.b16 %v305, %v304
    %v320 = vpack.c.b16 %v307, %v306
    %v321 = vpack.c.b16 %v309, %v308
    %v322 = vpack.c.b16 %v311, %v310
    %v323 = vpack.c.b16 %v313, %v312
    %v324 = vpack.c.b16 %v315, %v314
    %v325 = vpack.c.b16 %v317, %v316
    %334 = vmatpush.bf16.msra.mxu0 %v325
    %335 = vmatpush.bf16.msra.mxu0 %v324
    %336 = vmatpush.bf16.msra.mxu0 %v323
    %337 = vmatpush.bf16.msra.mxu0 %v322
    %338 = vmatpush.bf16.msra.mxu0 %v321
    %339 = vmatpush.bf16.msra.mxu0 %v320
    %340 = vmatpush.bf16.msra.mxu0 %v319
    %341 = vmatpush.bf16.msra.mxu0 %v318
    %342 = vmatmul.bf16.gmra.mxu0 %v90
    %v343 = vpop.f32.mrf.mxu0
    %v344 = vadd.f32 0.0, %v343
    %v345 = vpop.f32.mrf.mxu0
    %346 = vdwg.mxu0
    %v347 = vadd.f32 %v285, %v344
    %v364 = vunpack.c.l.b16 %v144
    %v365 = vunpack.c.l.b16 %v145
    %v366 = vunpack.c.l.b16 %v146
    %v367 = vunpack.c.l.b16 %v147
    %v368 = vunpack.c.l.b16 %v148
    %v369 = vunpack.c.l.b16 %v149
    %v370 = vunpack.c.l.b16 %v150
    %v371 = vunpack.c.l.b16 %v151
    %v372 = vunpack.c.l.b16 %v152
    %v373 = vunpack.c.l.b16 %v153
    %v374 = vunpack.c.l.b16 %v154
    %v375 = vunpack.c.l.b16 %v155
    %v376 = vunpack.c.l.b16 %v156
    %v377 = vunpack.c.l.b16 %v157
    %v378 = vunpack.c.l.b16 %v158
    %v379 = vunpack.c.l.b16 %v159
    %v380 = vpack.c.b16 %v365, %v364
    %v381 = vpack.c.b16 %v367, %v366
    %v382 = vpack.c.b16 %v369, %v368
    %v383 = vpack.c.b16 %v371, %v370
    %v384 = vpack.c.b16 %v373, %v372
    %v385 = vpack.c.b16 %v375, %v374
    %v386 = vpack.c.b16 %v377, %v376
    %v387 = vpack.c.b16 %v379, %v378
    %396 = vmatpush.bf16.msra.mxu0 %v387
    %397 = vmatpush.bf16.msra.mxu0 %v386
    %398 = vmatpush.bf16.msra.mxu0 %v385
    %399 = vmatpush.bf16.msra.mxu0 %v384
    %400 = vmatpush.bf16.msra.mxu0 %v383
    %401 = vmatpush.bf16.msra.mxu0 %v382
    %402 = vmatpush.bf16.msra.mxu0 %v381
    %403 = vmatpush.bf16.msra.mxu0 %v380
    %404 = vmatmul.bf16.gmra.mxu0 %v93
    %v405 = vpop.f32.mrf.mxu0
    %v406 = vadd.f32 0.0, %v405
    %v407 = vpop.f32.mrf.mxu0
    %408 = vdwg.mxu0
    %v409 = vsub.f32 %v347, %v406
    %v411 = vperm.slane %v160, 0
    %v413 = vadd.f32 %v409, %v411
    %414 = vmatpush.bf16.msra.mxu0 %v202
    %415 = vmatpush.bf16.msra.mxu0 %v201
    %416 = vmatpush.bf16.msra.mxu0 %v200
    %417 = vmatpush.bf16.msra.mxu0 %v199
    %418 = vmatpush.bf16.msra.mxu0 %v198
    %419 = vmatpush.bf16.msra.mxu0 %v197
    %420 = vmatpush.bf16.msra.mxu0 %v196
    %421 = vmatpush.bf16.msra.mxu0 %v195
    %422 = vmatmul.bf16.gmra.mxu0 %v88
    %v423 = vpop.f32.mrf.mxu0
    %v424 = vadd.f32 0.0, %v423
    %v425 = vpop.f32.mrf.mxu0
    %426 = vdwg.mxu0
    %427 = vmatpush.bf16.msra.mxu0 %v263
    %428 = vmatpush.bf16.msra.mxu0 %v262
    %429 = vmatpush.bf16.msra.mxu0 %v261
    %430 = vmatpush.bf16.msra.mxu0 %v260
    %431 = vmatpush.bf16.msra.mxu0 %v259
    %432 = vmatpush.bf16.msra.mxu0 %v258
    %433 = vmatpush.bf16.msra.mxu0 %v257
    %434 = vmatpush.bf16.msra.mxu0 %v256
    %435 = vmatmul.bf16.gmra.mxu0 %v85
    %v436 = vpop.f32.mrf.mxu0
    %v437 = vadd.f32 %v424, %v436
    %v438 = vpop.f32.mrf.mxu0
    %439 = vdwg.mxu0
    %440 = vmatpush.bf16.msra.mxu0 %v387
    %441 = vmatpush.bf16.msra.mxu0 %v386
    %442 = vmatpush.bf16.msra.mxu0 %v385
    %443 = vmatpush.bf16.msra.mxu0 %v384
    %444 = vmatpush.bf16.msra.mxu0 %v383
    %445 = vmatpush.bf16.msra.mxu0 %v382
    %446 = vmatpush.bf16.msra.mxu0 %v381
    %447 = vmatpush.bf16.msra.mxu0 %v380
    %448 = vmatmul.bf16.gmra.mxu0 %v90
    %v449 = vpop.f32.mrf.mxu0
    %v450 = vadd.f32 0.0, %v449
    %v451 = vpop.f32.mrf.mxu0
    %452 = vdwg.mxu0
    %v453 = vadd.f32 %v437, %v450
    %454 = vmatpush.bf16.msra.mxu0 %v325
    %455 = vmatpush.bf16.msra.mxu0 %v324
    %456 = vmatpush.bf16.msra.mxu0 %v323
    %457 = vmatpush.bf16.msra.mxu0 %v322
    %458 = vmatpush.bf16.msra.mxu0 %v321
    %459 = vmatpush.bf16.msra.mxu0 %v320
    %460 = vmatpush.bf16.msra.mxu0 %v319
    %461 = vmatpush.bf16.msra.mxu0 %v318
    %462 = vmatmul.bf16.gmra.mxu0 %v93
    %v463 = vpop.f32.mrf.mxu0
    %v464 = vadd.f32 0.0, %v463
    %v465 = vpop.f32.mrf.mxu0
    %466 = vdwg.mxu0
    %v467 = vadd.f32 %v453, %v464
    %v469 = vperm.slane %v162, 0
    %v471 = vadd.f32 %v467, %v469
    %v472 = vtanh.pop %v413
    %473 = vst [vmem:[#allocation10] sm:$0xff] %v472
    %v474 = vtanh.pop %v471
    %s475 = scalar_lea.vmem [#allocation10], 8
    %476 = vst [vmem:[%s475] sm:$0xff] %v474
    // Predicated region
    $region38: #{tpu_custom_call.1} parent=1 // pred_check
      _
    $region39: #{tpu_custom_call.1} parent=1 // pred_check_branch
      %478 = sbr.rel (0) target = $region41
    $region40: #{tpu_custom_call.1} parent=1 // pred_region
      %480 = vsyncadd [#allocation4], 0
      %s481 = sshll.u32 [#allocation10], 4
      %s482 = int_to_ptr.vmem [resolvable:$true] %s481
      %s483 = sshll.u32 %s5, 4
      %s484 = int_to_ptr.hbm [resolvable:$true] %s483
      %489 = dma.vmem_to_hbm [thread:$0]  %s482, 256, %s484, [#allocation4], 128, 128, 8
    $region41: #{tpu_custom_call.1} parent=1 // pred_fallthru
      _
    // Predicated region
    $region42: #{tpu_custom_call.1} parent=1 // pred_check
      _
    $region43: #{tpu_custom_call.1} parent=1 // pred_check_branch
      %491 = sbr.rel (0) target = $region45
    $region44: #{tpu_custom_call.1} parent=1 // pred_region
      %493 = dma.done [#allocation4], 256
    $region45: #{tpu_custom_call.1} parent=1 // pred_fallthru
      _
    %494 = vsyncpa [#allocation3], 1
    %495 = vsyncpa [#allocation6], 1
    %496 = vsyncpa [#allocation9], 1
    %497 = vsyncpa [#allocation4], 1

</llo_original>
